<compile_context>
chip_gen: v7x
topology: tpu7x:2x2x1
jax: 0.10.0
libtpu: 0.0.40
codegen_flags: <defaults>
</compile_context>

<pallas_src>
import math

import jax
import jax.numpy as jnp
from jax import lax
from jax.experimental import pallas as pl
from jax.experimental.pallas import tpu as pltpu


def _round_up(x, m):
    return ((x + m - 1) // m) * m


# ---------------------------------------------------------------------------
# Kernel 1: fused (im2col-matmul conv1) + BatchNorm(inference) + ReLU
#   Two output pixels are packed per 128-lane row via a block-diagonal weight,
#   so both the matmul N-dim and every output store are lane-dense.
# ---------------------------------------------------------------------------
def _conv_bn_relu_kernel(p_ref, w_ref, scale_ref, shift_ref, o_ref):
    # p_ref:     (tm2, 2K)   bf16 im2col patches, 2 output pixels per row
    # w_ref:     (2K, 128)   bf16 block-diagonal conv weight (resident)
    # scale_ref: (1, 128)    f32  gamma / sqrt(var+eps), duplicated per pixel half
    # shift_ref: (1, 128)    f32  beta - mean*scale, duplicated per pixel half
    # o_ref:     (tm2, 128)  f32  packed [pixel0 ch0..63 | pixel1 ch0..63]
    acc = jnp.dot(p_ref[...], w_ref[...], preferred_element_type=jnp.float32)
    y = acc * scale_ref[...] + shift_ref[...]
    o_ref[...] = jnp.maximum(y, 0.0).astype(o_ref.dtype)


def _conv_bn_relu(patches2, w2, scale2, shift2, *, tm_pack=512):
    """patches2: (M2, 2K) bf16 packed patch pairs.  Returns (M2, 128) f32."""
    M2, K2 = patches2.shape
    Cout2 = w2.shape[1]                       # 128
    tm2 = _round_up(min(tm_pack, _round_up(M2, 16)), 16)   # bf16 sublane tile
    Mp2 = _round_up(M2, tm2)
    if Mp2 != M2:                             # pad packed rows so the grid tiles evenly
        patches2 = jnp.pad(patches2, ((0, Mp2 - M2), (0, 0)))

    out = pl.pallas_call(
        _conv_bn_relu_kernel,
        out_shape=jax.ShapeDtypeStruct((Mp2, Cout2), jnp.float32),
        grid_spec=pltpu.PrefetchScalarGridSpec(
            num_scalar_prefetch=0,
            grid=(Mp2 // tm2,),
            in_specs=[
                pl.BlockSpec((tm2, K2), lambda i: (i, 0)),     # streaming patches
                pl.BlockSpec((K2, Cout2), lambda i: (0, 0)),   # resident weight
                pl.BlockSpec((1, Cout2), lambda i: (0, 0)),    # resident BN scale
                pl.BlockSpec((1, Cout2), lambda i: (0, 0)),    # resident BN shift
            ],
            out_specs=pl.BlockSpec((tm2, Cout2), lambda i: (i, 0)),
        ),
        compiler_params=pltpu.CompilerParams(
            dimension_semantics=("parallel",),
            vmem_limit_bytes=32 * 1024 * 1024),
    )(patches2, w2, scale2, shift2)
    return out[:M2]


# ---------------------------------------------------------------------------
# Kernel 2: maxpool 3x3, stride 2, pad 1 on the packed conv output.
#   Input lanes [0:C] hold even-W columns, [C:2C] odd-W columns (free view of
#   the conv kernel's packed output), so the stride-2 W selection needs no
#   strided accesses.  H stride-2 is a leading-dim reshape.  Zero "padding"
#   is exact because the conv output is post-ReLU (>= 0).
# ---------------------------------------------------------------------------
def _maxpool_kernel(x_ref, halo_ref, o_ref):
    # x_ref:    (1, 2*th, Wp, 2C)  packed conv rows for this output-row band
    # halo_ref: (1, 1,    Wp, 2C)  conv row just above the band (row 0 is re-read
    #                              for the first band, which is idempotent under max)
    # o_ref:    (1, th,   Wp, C)
    _, th, Wp, C = o_ref.shape

    def wmax(t):
        # 3-wide max along W: out[:, wo] = max(y[:, 2wo], y[:, 2wo+1], y[:, 2wo-1])
        e, o = t[..., :C], t[..., C:]
        m = jnp.maximum(e, o)
        o_sh = jnp.concatenate([jnp.zeros_like(o[:, :1, :]), o[:, :-1, :]], axis=1)
        return jnp.maximum(m, o_sh)

    cw = wmax(x_ref[0])          # (2*th, Wp, C)
    cwh = wmax(halo_ref[0])      # (1, Wp, C)

    # 3-wide max along H with stride 2: rows {2h, 2h+1, 2h-1}
    cw2 = cw.reshape(th, 2, Wp, C)
    ev, od = cw2[:, 0], cw2[:, 1]
    if th > 1:
        od_prev = jnp.concatenate([cwh, od[:th - 1]], axis=0)
    else:
        od_prev = cwh
    o_ref[0] = jnp.maximum(jnp.maximum(ev, od), od_prev).astype(o_ref.dtype)


def _maxpool_3x3_s2_p1(y_flat, B, Hc, Wc, C, *, band_rows=16):
    """y_flat: (B*Hc*Wc, C) f32 post-ReLU conv output.  Returns (B, Hp, Wp, C)."""
    Hp = (Hc - 1) // 2 + 1
    Wp = (Wc - 1) // 2 + 1
    y = y_flat.reshape(B, Hc, Wc, C)
    if Wc % 2:   # rare (stem sizes are even): zero-pad so W pairs pack into 2C lanes
        y = jnp.pad(y, ((0, 0), (0, 0), (0, 1), (0, 0)))
    if Hc % 2:
        y = jnp.pad(y, ((0, 0), (0, 1), (0, 0), (0, 0)))
    packed = y.reshape(B, 2 * Hp, Wp, 2 * C)   # free view: lanes [0:C]=even col, [C:2C]=odd

    th = min(band_rows, Hp)
    while Hp % th:               # pick a divisor so no partial bands are needed
        th -= 1
    nb = Hp // th

    return pl.pallas_call(
        _maxpool_kernel,
        out_shape=jax.ShapeDtypeStruct((B, Hp, Wp, C), y.dtype),
        grid_spec=pltpu.PrefetchScalarGridSpec(
            num_scalar_prefetch=0,
            grid=(B, nb),
            in_specs=[
                pl.BlockSpec((1, 2 * th, Wp, 2 * C), lambda b, i: (b, i, 0, 0)),
                # 1-row halo: conv row 2*th*i - 1 (clamped to 0 for the first band)
                pl.BlockSpec((1, 1, Wp, 2 * C),
                             lambda b, i: (b, jnp.maximum(2 * th * i - 1, 0), 0, 0)),
            ],
            out_specs=pl.BlockSpec((1, th, Wp, C), lambda b, i: (b, i, 0, 0)),
        ),
        compiler_params=pltpu.CompilerParams(
            dimension_semantics=("parallel", "parallel"),
            vmem_limit_bytes=32 * 1024 * 1024),
    )(packed, packed)


# ---------------------------------------------------------------------------
# Wrapper: full visible_module forward (NCHW in / NCHW out, like PyTorch)
# ---------------------------------------------------------------------------
def _im2col_7x7_s2(x_nhwc):
    """7x7, stride 2, pad 3 patch extraction.  Returns ((B*Hc*Wc, 49*Cin), Hc, Wc)."""
    B, H, W, Cin = x_nhwc.shape
    Hc = (H - 1) // 2 + 1
    Wc = (W - 1) // 2 + 1
    xp = jnp.pad(x_nhwc, ((0, 0), (3, 3), (3, 3), (0, 0)))
    cols = []
    for kh in range(7):
        for kw in range(7):
            cols.append(xp[:, kh:kh + 2 * Hc - 1:2, kw:kw + 2 * Wc - 1:2, :])
    patches = jnp.concatenate(cols, axis=-1)          # (B, Hc, Wc, 49*Cin)
    return patches.reshape(B * Hc * Wc, 49 * Cin), Hc, Wc


def visible_module_forward(x, conv_w, bn_gamma, bn_beta, bn_mean, bn_var,
                           *, eps=1e-5, tm_pixels=1024):
    """x: (B, 3, H, W) NCHW.  conv_w: (64, 3, 7, 7) (PyTorch OIHW).
    Returns (B, 64, Hp, Wp) NCHW, matching the PyTorch module."""
    B, Cin, H, W = x.shape
    Cout = conv_w.shape[0]
    K = 49 * Cin

    # bf16 activations for the streamed patches; accumulation stays f32 on the MXU.
    x_nhwc = jnp.transpose(x, (0, 2, 3, 1)).astype(jnp.bfloat16)
    patches, Hc, Wc = _im2col_7x7_s2(x_nhwc)           # (M, K) bf16
    M0 = patches.shape[0]
    if M0 % 2:                                         # pair-packing needs even pixel count
        patches = jnp.pad(patches, ((0, 1), (0, 0)))
    M = patches.shape[0]
    patches2 = patches.reshape(M // 2, 2 * K)          # free view: 2 pixels per row

    # Block-diagonal weight -> each 128-lane output row = 2 pixels x 64 channels.
    w_mat = jnp.transpose(conv_w, (2, 3, 1, 0)).reshape(K, Cout).astype(jnp.bfloat16)
    w2 = jnp.zeros((2 * K, 2 * Cout), jnp.bfloat16)
    w2 = w2.at[:K, :Cout].set(w_mat).at[K:, Cout:].set(w_mat)

    scale = (bn_gamma / jnp.sqrt(bn_var + eps)).astype(jnp.float32)
    shift = (bn_beta - bn_mean * scale).astype(jnp.float32)
    scale2 = jnp.concatenate([scale, scale]).reshape(1, 2 * Cout)
    shift2 = jnp.concatenate([shift, shift]).reshape(1, 2 * Cout)

    y2 = _conv_bn_relu(patches2, w2, scale2, shift2, tm_pack=tm_pixels // 2)
    y_flat = y2.reshape(M, Cout)[:B * Hc * Wc]         # free unpack of the pixel pairs

    pooled = _maxpool_3x3_s2_p1(y_flat, B, Hc, Wc, Cout)
    return jnp.transpose(pooled, (0, 3, 1, 2))          # back to NCHW


# ---------------------------------------------------------------------------
# Pure-JAX reference (same stem, same bf16 operand rounding) for verification
# ---------------------------------------------------------------------------
def stem_reference(x, w, gamma, beta, mean, var, eps=1e-5):
    xq = x.astype(jnp.bfloat16).astype(jnp.float32)
    wq = w.astype(jnp.bfloat16).astype(jnp.float32)
    y = lax.conv_general_dilated(
        xq, wq, window_strides=(2, 2), padding=((3, 3), (3, 3)),
        dimension_numbers=("NCHW", "OIHW", "NCHW"),
        precision=lax.Precision.HIGHEST)
    scale = (gamma / jnp.sqrt(var + eps)).reshape(1, -1, 1, 1)
    shift = (beta - mean * gamma / jnp.sqrt(var + eps)).reshape(1, -1, 1, 1)
    y = jnp.maximum(y * scale + shift, 0.0)
    return lax.reduce_window(
        y, -jnp.inf, lax.max,
        window_dimensions=(1, 1, 3, 3),
        window_strides=(1, 1, 2, 2),
        padding=((0, 0), (0, 0), (1, 1), (1, 1)))


if __name__ == "__main__":
    key = jax.random.PRNGKey(0)
    k_x, k_w, k_g, k_b, k_m, k_v = jax.random.split(key, 6)

    # Small shapes consistent with the module: batch=2, 3 input channels, 16x16.
    B, Cin, H, W = 2, 3, 16, 16
    Cout = 64

    x = jax.random.normal(k_x, (B, Cin, H, W), jnp.float32)

    fan_in = Cin * 7 * 7
    bound = 1.0 / math.sqrt(fan_in)
    conv_w = jax.random.uniform(k_w, (Cout, Cin, 7, 7), jnp.float32,
                                minval=-bound, maxval=bound)
    bn_gamma = jax.random.uniform(k_g, (Cout,), jnp.float32, minval=0.5, maxval=1.5)
    bn_beta = 0.1 * jax.random.normal(k_b, (Cout,), jnp.float32)
    bn_mean = 0.1 * jax.random.normal(k_m, (Cout,), jnp.float32)
    bn_var = jax.random.uniform(k_v, (Cout,), jnp.float32, minval=0.5, maxval=1.5)

    out = visible_module_forward(x, conv_w, bn_gamma, bn_beta, bn_mean, bn_var)
    out = jax.block_until_ready(out)

    ref = stem_reference(x, conv_w, bn_gamma, bn_beta, bn_mean, bn_var)
    assert out.shape == (B, Cout, 4, 4), out.shape
    max_err = jnp.max(jnp.abs(out - ref))
    assert jnp.allclose(out, ref, atol=1e-3, rtol=1e-3), \
        f"mismatch vs reference: max abs err {max_err}"

    print("KERNEL_OK")
</pallas_src>

<mosaic_0001>
module attributes {stable_mosaic.version = 11 : i64} {
  func.func @_conv_bn_relu_kernel(%arg0: i32, %arg1: memref<64x294xbf16, #tpu.memory_space<vmem>>, %arg2: memref<294x128xbf16, #tpu.memory_space<vmem>>, %arg3: memref<1x128xf32, #tpu.memory_space<vmem>>, %arg4: memref<1x128xf32, #tpu.memory_space<vmem>>, %arg5: memref<64x128xf32, #tpu.memory_space<vmem>>) attributes {dimension_semantics = [#tpu.dimension_semantics<parallel>], iteration_bounds = array<i64: 1>, scalar_prefetch = 0 : i64, scratch_operands = 0 : i64, tpu.core_type = #tpu.core_type<tc>, window_params = [{transform_indices = @transform_0, window_bounds = array<i64: 64, 294>}, {pipeline_mode = #tpu.pipeline_mode<synchronous>, transform_indices = @transform_1, window_bounds = array<i64: 294, 128>}, {pipeline_mode = #tpu.pipeline_mode<synchronous>, transform_indices = @transform_2, window_bounds = array<i64: 1, 128>}, {pipeline_mode = #tpu.pipeline_mode<synchronous>, transform_indices = @transform_3, window_bounds = array<i64: 1, 128>}, {transform_indices = @transform_4, window_bounds = array<i64: 64, 128>}]} {
    %c0 = arith.constant 0 : index
    %c0_0 = arith.constant 0 : index
    %0 = vector.load %arg1[%c0, %c0_0] : memref<64x294xbf16, #tpu.memory_space<vmem>>, vector<64x294xbf16>
    %c0_1 = arith.constant 0 : index
    %c0_2 = arith.constant 0 : index
    %1 = vector.load %arg2[%c0_1, %c0_2] : memref<294x128xbf16, #tpu.memory_space<vmem>>, vector<294x128xbf16>
    %cst = arith.constant dense<0.000000e+00> : vector<64x128xf32>
    %2 = tpu.matmul %0, %1, %cst {dimension_numbers = #tpu.dot_dimension_numbers<[1], [0], [0], [1], [0, 0, 1, 1], [], []>} : vector<64x294xbf16>, vector<294x128xbf16>, vector<64x128xf32> -> vector<64x128xf32>
    %c0_3 = arith.constant 0 : index
    %c0_4 = arith.constant 0 : index
    %3 = vector.load %arg3[%c0_3, %c0_4] : memref<1x128xf32, #tpu.memory_space<vmem>>, vector<1x128xf32>
    %4 = vector.broadcast %3 : vector<1x128xf32> to vector<64x128xf32>
    %5 = arith.mulf %2, %4 : vector<64x128xf32>
    %c0_5 = arith.constant 0 : index
    %c0_6 = arith.constant 0 : index
    %6 = vector.load %arg4[%c0_5, %c0_6] : memref<1x128xf32, #tpu.memory_space<vmem>>, vector<1x128xf32>
    %7 = vector.broadcast %6 : vector<1x128xf32> to vector<64x128xf32>
    %8 = arith.addf %5, %7 : vector<64x128xf32>
    %cst_7 = arith.constant 0.000000e+00 : f32
    %9 = vector.broadcast %cst_7 : f32 to vector<64x128xf32>
    %10 = arith.maximumf %8, %9 : vector<64x128xf32>
    %c0_8 = arith.constant 0 : index
    %c0_9 = arith.constant 0 : index
    %11 = vector.load %arg5[%c0_8, %c0_9] : memref<64x128xf32, #tpu.memory_space<vmem>>, vector<64x128xf32>
    tpu.vector_store %arg5[%c0_8, %c0_9], %10 {strides = array<i32>} : memref<64x128xf32, #tpu.memory_space<vmem>>, vector<64x128xf32>,
    return
  }
  func.func @transform_0(%arg0: i32) -> (i32, i32) {
    %c0_i32 = arith.constant 0 : i32
    %c0_i32_0 = arith.constant 0 : i32
    return %arg0, %c0_i32 : i32, i32
  }
  func.func @transform_1(%arg0: i32) -> (i32, i32) {
    %c0_i32 = arith.constant 0 : i32
    %c0_i32_0 = arith.constant 0 : i32
    %c0_i32_1 = arith.constant 0 : i32
    return %c0_i32, %c0_i32_0 : i32, i32
  }
  func.func @transform_2(%arg0: i32) -> (i32, i32) {
    %c0_i32 = arith.constant 0 : i32
    %c0_i32_0 = arith.constant 0 : i32
    %c0_i32_1 = arith.constant 0 : i32
    return %c0_i32, %c0_i32_0 : i32, i32
  }
  func.func @transform_3(%arg0: i32) -> (i32, i32) {
    %c0_i32 = arith.constant 0 : i32
    %c0_i32_0 = arith.constant 0 : i32
    %c0_i32_1 = arith.constant 0 : i32
    return %c0_i32, %c0_i32_0 : i32, i32
  }
  func.func @transform_4(%arg0: i32) -> (i32, i32) {
    %c0_i32 = arith.constant 0 : i32
    %c0_i32_0 = arith.constant 0 : i32
    return %arg0, %c0_i32 : i32, i32
  }
}

</mosaic_0001>

<llo_original>
// kernel: tpu_custom_call.1
$region0: #{tpu_custom_call.1}
  #allocation0 [shape = 'u32[]', space=smem, size = 0x4, offset = 0x4, fixed_abs, tag = 'smem constant byte address 0x4 - core index']
  #allocation1 [shape = 'u32[144,128]{1,0:T(1,128)}', space=vmem, size = 0x12000, scoped, tag = 'internal scratch']
  %s0 = inlined_call_operand.hbm [shape: bf16[64,294], index: 0, kind: input, shape index: {}]
  %s1 = inlined_call_operand.hbm [shape: bf16[294,128], index: 1, kind: input, shape index: {}]
  %s2 = inlined_call_operand.vmem [shape: f32[1,128], index: 2, kind: input, shape index: {}]
  %s3 = inlined_call_operand.vmem [shape: f32[1,128], index: 3, kind: input, shape index: {}]
  %s4 = inlined_call_operand.hbm [shape: f32[64,128], index: 4, kind: output, shape index: {}]
  %s5 = sld [smem:[#allocation0]]
  $region34: #{tpu_custom_call.1} parent=0
    _
  %s7 = ssub.s32 1, %s5
  %s8 = scalar_select 0, %s7, %s5
  $region1: #{tpu_custom_call.1} parent=0
    #allocation2 [shape = 'u8[49152]{0}', space=vmem, size = 0xc000, scoped, tag = 'input window, operand 0, single buffered']
    #allocation3 [shape = 's32[1]{0}', space=sflag, size = 0x4, scoped, tag = 'scoped memory for tpu_custom_call.1']
    #allocation4 [shape = 's32[1]{0}', space=sflag, size = 0x4, scoped, tag = 'scoped memory for tpu_custom_call.1']
    #allocation5 [shape = 'u8[75776]{0}', space=vmem, size = 0x12800, scoped, tag = 'input window, operand 1, single buffered']
    #allocation6 [shape = 's32[1]{0}', space=sflag, size = 0x4, scoped, tag = 'scoped memory for tpu_custom_call.1']
    #allocation7 [shape = 'u8[32768]{0}', space=vmem, size = 0x8000, scoped, tag = 'output window, operand 0, single buffered']
    %9 = vsyncpa [#allocation3], 0
    %10 = vsyncpa [#allocation6], 0
    %11 = vsyncpa [#allocation4], 0
    // Predicated region
    $region2: #{tpu_custom_call.1} parent=1 // pred_check
      _
    $region3: #{tpu_custom_call.1} parent=1 // pred_check_branch
      %13 = sbr.rel (0) target = $region5
    $region4: #{tpu_custom_call.1} parent=1 // pred_region
      %s15 = ssub.s32 1536, 1536
      %16 = vsyncadd [#allocation3], %s15
      %s17 = sshll.u32 [#allocation2], 4
      %s18 = int_to_ptr.vmem [resolvable:$true] %s17
      %23 = dma.hbm_to_vmem [thread:$0]  %s0, 1536, %s18, [#allocation3], 192, 192, 12
    $region5: #{tpu_custom_call.1} parent=1 // pred_fallthru
      _
    // Predicated region
    $region6: #{tpu_custom_call.1} parent=1 // pred_check
      _
    $region7: #{tpu_custom_call.1} parent=1 // pred_check_branch
      %25 = sbr.rel (0) target = $region9
    $region8: #{tpu_custom_call.1} parent=1 // pred_region
      %s27 = ssub.s32 2368, 2368
      %28 = vsyncadd [#allocation6], %s27
      %s29 = sshll.u32 [#allocation5], 4
      %s30 = int_to_ptr.vmem [resolvable:$true] %s29
      %35 = dma.hbm_to_vmem [thread:$0]  %s1, 2368, %s30, [#allocation6], 64, 64, 4
    $region9: #{tpu_custom_call.1} parent=1 // pred_fallthru
      _
    // Predicated region
    $region10: #{tpu_custom_call.1} parent=1 // pred_check
      _
    $region11: #{tpu_custom_call.1} parent=1 // pred_check_branch
      %37 = sbr.rel (0) target = $region13
    $region12: #{tpu_custom_call.1} parent=1 // pred_region
      _
    $region13: #{tpu_custom_call.1} parent=1 // pred_fallthru
      _
    // Predicated region
    $region14: #{tpu_custom_call.1} parent=1 // pred_check
      _
    $region15: #{tpu_custom_call.1} parent=1 // pred_check_branch
      %39 = sbr.rel (0) target = $region17
    $region16: #{tpu_custom_call.1} parent=1 // pred_region
      _
    $region17: #{tpu_custom_call.1} parent=1 // pred_fallthru
      _
    // Predicated region
    $region18: #{tpu_custom_call.1} parent=1 // pred_check
      _
    $region19: #{tpu_custom_call.1} parent=1 // pred_check_branch
      %41 = sbr.rel (0) target = $region21
    $region20: #{tpu_custom_call.1} parent=1 // pred_region
      %42 = dma.done [#allocation3], 1536
    $region21: #{tpu_custom_call.1} parent=1 // pred_fallthru
      _
    // Predicated region
    $region22: #{tpu_custom_call.1} parent=1 // pred_check
      _
    $region23: #{tpu_custom_call.1} parent=1 // pred_check_branch
      %44 = sbr.rel (0) target = $region25
    $region24: #{tpu_custom_call.1} parent=1 // pred_region
      %45 = dma.done [#allocation6], 2368
    $region25: #{tpu_custom_call.1} parent=1 // pred_fallthru
      _
    %v47 = vld [vmem:[#allocation2] sm:$0xff]
    %v48 = vld [vmem:[#allocation2 + $0x8] sm:$0xf]
    %v49 = vld [vmem:[#allocation2 + $0xc] sm:$0xff]
    %v50 = vld [vmem:[#allocation2 + $0x14] sm:$0xf]
    %v51 = vld [vmem:[#allocation2 + $0x18] sm:$0xff]
    %v52 = vld [vmem:[#allocation2 + $0x20] sm:$0xf]
    %v53 = vld [vmem:[#allocation2 + $0x24] sm:$0xff]
    %v54 = vld [vmem:[#allocation2 + $0x2c] sm:$0xf]
    %v55 = vld [vmem:[#allocation2 + $0x30] sm:$0xff]
    %v56 = vld [vmem:[#allocation2 + $0x38] sm:$0xf]
    %v57 = vld [vmem:[#allocation2 + $0x3c] sm:$0xff]
    %v58 = vld [vmem:[#allocation2 + $0x44] sm:$0xf]
    %v59 = vld [vmem:[#allocation2 + $0x48] sm:$0xff]
    %v60 = vld [vmem:[#allocation2 + $0x50] sm:$0xf]
    %v61 = vld [vmem:[#allocation2 + $0x54] sm:$0xff]
    %v62 = vld [vmem:[#allocation2 + $0x5c] sm:$0xf]
    %v63 = vld [vmem:[#allocation5] sm:$0xf]
    %v64 = vld [vmem:[#allocation5 + $0x4] sm:$0xf]
    %v65 = vld [vmem:[#allocation5 + $0x8] sm:$0xf]
    %v66 = vld [vmem:[#allocation5 + $0xc] sm:$0xf]
    %v67 = vld [vmem:[#allocation5 + $0x10] sm:$0xf]
    %v68 = vld [vmem:[#allocation5 + $0x14] sm:$0xf]
    %v69 = vld [vmem:[#allocation5 + $0x18] sm:$0xf]
    %v70 = vld [vmem:[#allocation5 + $0x1c] sm:$0xf]
    %v71 = vld [vmem:[#allocation5 + $0x20] sm:$0xf]
    %v72 = vld [vmem:[#allocation5 + $0x24] sm:$0xf]
    %v73 = vld [vmem:[#allocation5 + $0x28] sm:$0xf]
    %v74 = vld [vmem:[#allocation5 + $0x2c] sm:$0xf]
    %v75 = vld [vmem:[#allocation5 + $0x30] sm:$0xf]
    %v76 = vld [vmem:[#allocation5 + $0x34] sm:$0xf]
    %v77 = vld [vmem:[#allocation5 + $0x38] sm:$0xf]
    %v78 = vld [vmem:[#allocation5 + $0x3c] sm:$0xf]
    %v79 = vld [vmem:[#allocation5 + $0x40] sm:$0xf]
    %v80 = vld [vmem:[#allocation5 + $0x44] sm:$0xf]
    %v81 = vld [vmem:[#allocation5 + $0x48] sm:$0xf]
    %v82 = vld [vmem:[#allocation5 + $0x4c] sm:$0xf]
    %v83 = vld [vmem:[#allocation5 + $0x50] sm:$0xf]
    %v84 = vld [vmem:[#allocation5 + $0x54] sm:$0xf]
    %v85 = vld [vmem:[#allocation5 + $0x58] sm:$0xf]
    %v86 = vld [vmem:[#allocation5 + $0x5c] sm:$0xf]
    %v87 = vld [vmem:[#allocation5 + $0x60] sm:$0xf]
    %v88 = vld [vmem:[#allocation5 + $0x64] sm:$0xf]
    %v89 = vld [vmem:[#allocation5 + $0x68] sm:$0xf]
    %v90 = vld [vmem:[#allocation5 + $0x6c] sm:$0xf]
    %v91 = vld [vmem:[#allocation5 + $0x70] sm:$0xf]
    %v92 = vld [vmem:[#allocation5 + $0x74] sm:$0xf]
    %v93 = vld [vmem:[#allocation5 + $0x78] sm:$0xf]
    %v94 = vld [vmem:[#allocation5 + $0x7c] sm:$0xf]
    %v95 = vld [vmem:[#allocation5 + $0x80] sm:$0xf]
    %v96 = vld [vmem:[#allocation5 + $0x84] sm:$0xf]
    %v97 = vld [vmem:[#allocation5 + $0x88] sm:$0xf]
    %v98 = vld [vmem:[#allocation5 + $0x8c] sm:$0xf]
    %v99 = vld [vmem:[#allocation5 + $0x90] sm:$0x7]
    %v116 = vunpack.c.l.b16 %v47
    %v117 = vunpack.c.h.b16 %v47
    %v118 = vunpack.c.l.b16 %v48
    %v119 = vunpack.c.l.b16 %v49
    %v120 = vunpack.c.h.b16 %v49
    %v121 = vunpack.c.l.b16 %v50
    %v122 = vunpack.c.l.b16 %v51
    %v123 = vunpack.c.h.b16 %v51
    %v124 = vunpack.c.l.b16 %v52
    %v125 = vunpack.c.l.b16 %v53
    %v126 = vunpack.c.h.b16 %v53
    %v127 = vunpack.c.l.b16 %v54
    %v128 = vunpack.c.l.b16 %v55
    %v129 = vunpack.c.h.b16 %v55
    %v130 = vunpack.c.l.b16 %v56
    %v131 = vunpack.c.l.b16 %v57
    %v132 = vunpack.c.h.b16 %v57
    %v133 = vunpack.c.l.b16 %v58
    %v134 = vunpack.c.l.b16 %v59
    %v135 = vunpack.c.h.b16 %v59
    %v136 = vunpack.c.l.b16 %v60
    %v137 = vunpack.c.l.b16 %v61
    %v138 = vunpack.c.h.b16 %v61
    %v139 = vunpack.c.l.b16 %v62
    %v140 = vpack.c.b16 %v119, %v116
    %v141 = vpack.c.b16 %v120, %v117
    %v142 = vpack.c.b16 %v121, %v118
    %v143 = vpack.c.b16 %v125, %v122
    %v144 = vpack.c.b16 %v126, %v123
    %v145 = vpack.c.b16 %v127, %v124
    %v146 = vpack.c.b16 %v131, %v128
    %v147 = vpack.c.b16 %v132, %v129
    %v148 = vpack.c.b16 %v133, %v130
    %v149 = vpack.c.b16 %v137, %v134
    %v150 = vpack.c.b16 %v138, %v135
    %v151 = vpack.c.b16 %v139, %v136
    %v197 = vunpack.c.l.b16 %v63
    %v198 = vunpack.c.l.b16 %v64
    %v199 = vunpack.c.l.b16 %v65
    %v200 = vunpack.c.l.b16 %v66
    %v201 = vunpack.c.l.b16 %v67
    %v202 = vunpack.c.l.b16 %v68
    %v203 = vunpack.c.l.b16 %v69
    %v204 = vunpack.c.l.b16 %v70
    %v205 = vunpack.c.l.b16 %v71
    %v206 = vunpack.c.l.b16 %v72
    %v207 = vunpack.c.l.b16 %v73
    %v208 = vunpack.c.l.b16 %v74
    %v209 = vunpack.c.l.b16 %v75
    %v210 = vunpack.c.l.b16 %v76
    %v211 = vunpack.c.l.b16 %v77
    %v212 = vunpack.c.l.b16 %v78
    %v213 = vunpack.c.l.b16 %v79
    %v214 = vunpack.c.l.b16 %v80
    %v215 = vunpack.c.l.b16 %v81
    %v216 = vunpack.c.l.b16 %v82
    %v217 = vunpack.c.l.b16 %v83
    %v218 = vunpack.c.l.b16 %v84
    %v219 = vunpack.c.l.b16 %v85
    %v220 = vunpack.c.l.b16 %v86
    %v221 = vunpack.c.l.b16 %v87
    %v222 = vunpack.c.l.b16 %v88
    %v223 = vunpack.c.l.b16 %v89
    %v224 = vunpack.c.l.b16 %v90
    %v225 = vunpack.c.l.b16 %v91
    %v226 = vunpack.c.l.b16 %v92
    %v227 = vunpack.c.l.b16 %v93
    %v228 = vunpack.c.l.b16 %v94
    %v229 = vunpack.c.l.b16 %v95
    %v230 = vunpack.c.l.b16 %v96
    %v231 = vunpack.c.l.b16 %v97
    %v232 = vunpack.c.l.b16 %v98
    %v233 = vunpack.c.l.b16 %v99
    %v234 = vpack.c.b16 %v198, %v197
    %v235 = vpack.c.b16 %v200, %v199
    %v236 = vpack.c.b16 %v202, %v201
    %v237 = vpack.c.b16 %v204, %v203
    %v238 = vpack.c.b16 %v206, %v205
    %v239 = vpack.c.b16 %v208, %v207
    %v240 = vpack.c.b16 %v210, %v209
    %v241 = vpack.c.b16 %v212, %v211
    %v242 = vpack.c.b16 %v214, %v213
    %v243 = vpack.c.b16 %v216, %v215
    %v244 = vpack.c.b16 %v218, %v217
    %v245 = vpack.c.b16 %v220, %v219
    %v246 = vpack.c.b16 %v222, %v221
    %v247 = vpack.c.b16 %v224, %v223
    %v248 = vpack.c.b16 %v226, %v225
    %v249 = vpack.c.b16 %v228, %v227
    %v250 = vpack.c.b16 %v230, %v229
    %v251 = vpack.c.b16 %v232, %v231
    %v252 = vpack.c.b16 %v233, %v233
    %vm271 = vcmask 310272
    %v273 = vsel %vm271, %v142, 0
    %v276 = vsel %vm271, %v145, 0
    %v279 = vsel %vm271, %v148, 0
    %v282 = vsel %vm271, %v151, 0
    %vm284 = vcmask 1042432
    %v286 = vsel %vm284, %v252, 0
    %288 = vmatprep.subr.bf16.mxu0 0
    %289 = vmatpush1.bf16.msra.mxu0 %v234
    %290 = vmatprep.subr.bf16.mxu0 0
    %291 = vmatpush1.bf16.msra.mxu0 %v235
    %292 = vmatprep.subr.bf16.mxu0 0
    %293 = vmatpush1.bf16.msra.mxu0 %v236
    %294 = vmatprep.subr.bf16.mxu0 0
    %295 = vmatpush1.bf16.msra.mxu0 %v237
    %296 = vmatprep.subr.bf16.mxu0 0
    %297 = vmatpush1.bf16.msra.mxu0 %v238
    %298 = vmatprep.subr.bf16.mxu0 0
    %299 = vmatpush1.bf16.msra.mxu0 %v239
    %300 = vmatprep.subr.bf16.mxu0 0
    %301 = vmatpush1.bf16.msra.mxu0 %v240
    %302 = vmatprep.subr.bf16.mxu0 0
    %303 = vmatpush1.bf16.msra.mxu0 %v241
    %304 = vmatprep.subr.bf16.mxu0 0
    %305 = vmatpush1.bf16.msra.mxu0 %v242
    %306 = vmatprep.subr.bf16.mxu0 0
    %307 = vmatpush1.bf16.msra.mxu0 %v243
    %308 = vmatprep.subr.bf16.mxu0 0
    %309 = vmatpush1.bf16.msra.mxu0 %v244
    %310 = vmatprep.subr.bf16.mxu0 0
    %311 = vmatpush1.bf16.msra.mxu0 %v245
    %312 = vmatprep.subr.bf16.mxu0 0
    %313 = vmatpush1.bf16.msra.mxu0 %v246
    %314 = vmatprep.subr.bf16.mxu0 0
    %315 = vmatpush1.bf16.msra.mxu0 %v247
    %316 = vmatprep.subr.bf16.mxu0 0
    %317 = vmatpush1.bf16.msra.mxu0 %v248
    %318 = vmatprep.subr.bf16.mxu0 0
    %319 = vmatpush1.bf16.msra.mxu0 %v249
    %320 = vmatprep.mubr.bf16.mxu0 %v141
    %321 = vmatmul.mubr.bf16.gmra.mrb[0].mxu0 %v140
    %v322 = vpop.f32.mrb[0].mxu0
    %v323 = vadd.f32 0.0, %v322
    %v324 = vpop.f32.mrb[0].mxu0
    %v325 = vpop.f32.mrb[0].mxu0
    %v326 = vadd.f32 0.0, %v325
    %v327 = vpop.f32.mrb[0].mxu0
    %328 = vmatprep.mubr.bf16.mxu0 %v144
    %329 = vmatmul.mubr.bf16.gmra.mrb[0].mxu0 %v143
    %v330 = vpop.f32.mrb[0].mxu0
    %v331 = vadd.f32 0.0, %v330
    %v332 = vpop.f32.mrb[0].mxu0
    %v333 = vpop.f32.mrb[0].mxu0
    %v334 = vadd.f32 0.0, %v333
    %v335 = vpop.f32.mrb[0].mxu0
    %336 = vmatprep.mubr.bf16.mxu0 %v147
    %337 = vmatmul.mubr.bf16.gmra.mrb[0].mxu0 %v146
    %v338 = vpop.f32.mrb[0].mxu0
    %v339 = vadd.f32 0.0, %v338
    %v340 = vpop.f32.mrb[0].mxu0
    %v341 = vpop.f32.mrb[0].mxu0
    %v342 = vadd.f32 0.0, %v341
    %v343 = vpop.f32.mrb[0].mxu0
    %344 = vmatprep.mubr.bf16.mxu0 %v150
    %345 = vmatmul.mubr.bf16.gmra.mrb[0].mxu0 %v149
    %v346 = vpop.f32.mrb[0].mxu0
    %v347 = vadd.f32 0.0, %v346
    %v348 = vpop.f32.mrb[0].mxu0
    %v349 = vpop.f32.mrb[0].mxu0
    %v350 = vadd.f32 0.0, %v349
    %v351 = vpop.f32.mrb[0].mxu0
    %352 = vdwg.mxu0
    %353 = vmatprep.subr.bf16.mxu0 0
    %354 = vmatpush1.bf16.msra.mxu0 %v250
    %355 = vmatprep.subr.bf16.mxu0 0
    %356 = vmatpush1.bf16.msra.mxu0 %v251
    %357 = vmatprep.subr.bf16.mxu0 0
    %358 = vmatpush1.bf16.msra.mxu0 %v286
    %359 = vmatprep.subr.bf16.mxu0 0
    %360 = vmatpush1.bf16.msra.mxu0 0
    %361 = vmatprep.subr.bf16.mxu0 0
    %362 = vmatpush1.bf16.msra.mxu0 0
    %363 = vmatprep.subr.bf16.mxu0 0
    %364 = vmatpush1.bf16.msra.mxu0 0
    %365 = vmatprep.subr.bf16.mxu0 0
    %366 = vmatpush1.bf16.msra.mxu0 0
    %367 = vmatprep.subr.bf16.mxu0 0
    %368 = vmatpush1.bf16.msra.mxu0 0
    %369 = vmatprep.subr.bf16.mxu0 0
    %370 = vmatpush1.bf16.msra.mxu0 0
    %371 = vmatprep.subr.bf16.mxu0 0
    %372 = vmatpush1.bf16.msra.mxu0 0
    %373 = vmatprep.subr.bf16.mxu0 0
    %374 = vmatpush1.bf16.msra.mxu0 0
    %375 = vmatprep.subr.bf16.mxu0 0
    %376 = vmatpush1.bf16.msra.mxu0 0
    %377 = vmatprep.subr.bf16.mxu0 0
    %378 = vmatpush1.bf16.msra.mxu0 0
    %379 = vmatprep.subr.bf16.mxu0 0
    %380 = vmatpush1.bf16.msra.mxu0 0
    %381 = vmatprep.subr.bf16.mxu0 0
    %382 = vmatpush1.bf16.msra.mxu0 0
    %383 = vmatprep.subr.bf16.mxu0 0
    %384 = vmatpush1.bf16.msra.mxu0 0
    %385 = vmatprep.mubr.bf16.mxu0 0
    %386 = vmatmul.mubr.bf16.gmra.mrb[0].mxu0 %v273
    %v387 = vpop.f32.mrb[0].mxu0
    %v388 = vadd.f32 %v323, %v387
    %v389 = vpop.f32.mrb[0].mxu0
    %v390 = vpop.f32.mrb[0].mxu0
    %v391 = vadd.f32 %v326, %v390
    %v392 = vpop.f32.mrb[0].mxu0
    %393 = vmatprep.mubr.bf16.mxu0 0
    %394 = vmatmul.mubr.bf16.gmra.mrb[0].mxu0 %v276
    %v395 = vpop.f32.mrb[0].mxu0
    %v396 = vadd.f32 %v331, %v395
    %v397 = vpop.f32.mrb[0].mxu0
    %v398 = vpop.f32.mrb[0].mxu0
    %v399 = vadd.f32 %v334, %v398
    %v400 = vpop.f32.mrb[0].mxu0
    %401 = vmatprep.mubr.bf16.mxu0 0
    %402 = vmatmul.mubr.bf16.gmra.mrb[0].mxu0 %v279
    %v403 = vpop.f32.mrb[0].mxu0
    %v404 = vadd.f32 %v339, %v403
    %v405 = vpop.f32.mrb[0].mxu0
    %v406 = vpop.f32.mrb[0].mxu0
    %v407 = vadd.f32 %v342, %v406
    %v408 = vpop.f32.mrb[0].mxu0
    %409 = vmatprep.mubr.bf16.mxu0 0
    %410 = vmatmul.mubr.bf16.gmra.mrb[0].mxu0 %v282
    %v411 = vpop.f32.mrb[0].mxu0
    %v412 = vadd.f32 %v347, %v411
    %v413 = vpop.f32.mrb[0].mxu0
    %v414 = vpop.f32.mrb[0].mxu0
    %v415 = vadd.f32 %v350, %v414
    %v416 = vpop.f32.mrb[0].mxu0
    %417 = vdwg.mxu0
    %v418 = vld [vmem:[%s2] sm:$0x1]
    %v420 = vlaneseq
    %v421 = vshrl.u32 %v420, 7
    %v422 = vsub.s32 0, %v421
    %v423 = vrot.slane %v418, %v422
    %v425 = vmul.f32 %v388, %v423
    %v426 = vmul.f32 %v391, %v423
    %v427 = vmul.f32 %v396, %v423
    %v428 = vmul.f32 %v399, %v423
    %v429 = vmul.f32 %v404, %v423
    %v430 = vmul.f32 %v407, %v423
    %v431 = vmul.f32 %v412, %v423
    %v432 = vmul.f32 %v415, %v423
    %v433 = vld [vmem:[%s3] sm:$0x1]
    %v435 = vlaneseq
    %v436 = vshrl.u32 %v435, 7
    %v437 = vsub.s32 0, %v436
    %v438 = vrot.slane %v433, %v437
    %v440 = vadd.f32 %v425, %v438
    %v441 = vadd.f32 %v426, %v438
    %v442 = vadd.f32 %v427, %v438
    %v443 = vadd.f32 %v428, %v438
    %v444 = vadd.f32 %v429, %v438
    %v445 = vadd.f32 %v430, %v438
    %v446 = vadd.f32 %v431, %v438
    %v447 = vadd.f32 %v432, %v438
    %v448 = vmax.f32 %v440, 0.0
    %v449 = vmax.f32 %v441, 0.0
    %v450 = vmax.f32 %v442, 0.0
    %v451 = vmax.f32 %v443, 0.0
    %v452 = vmax.f32 %v444, 0.0
    %v453 = vmax.f32 %v445, 0.0
    %v454 = vmax.f32 %v446, 0.0
    %v455 = vmax.f32 %v447, 0.0
    %456 = vst [vmem:[#allocation7] sm:$0xff] %v448
    %457 = vst [vmem:[#allocation7 + $0x8] sm:$0xff] %v449
    %458 = vst [vmem:[#allocation7 + $0x10] sm:$0xff] %v450
    %459 = vst [vmem:[#allocation7 + $0x18] sm:$0xff] %v451
    %460 = vst [vmem:[#allocation7 + $0x20] sm:$0xff] %v452
    %461 = vst [vmem:[#allocation7 + $0x28] sm:$0xff] %v453
    %462 = vst [vmem:[#allocation7 + $0x30] sm:$0xff] %v454
    %463 = vst [vmem:[#allocation7 + $0x38] sm:$0xff] %v455
    // Predicated region
    $region26: #{tpu_custom_call.1} parent=1 // pred_check
      _
    $region27: #{tpu_custom_call.1} parent=1 // pred_check_branch
      %465 = sbr.rel (0) target = $region29
    $region28: #{tpu_custom_call.1} parent=1 // pred_region
      %s467 = ssub.s32 1024, 1024
      %468 = vsyncadd [#allocation4], %s467
      %s469 = sshll.u32 [#allocation7], 4
      %s470 = int_to_ptr.vmem [resolvable:$true] %s469
      %475 = dma.vmem_to_hbm [thread:$0]  %s470, 1024, %s4, [#allocation4], 128, 128, 8
    $region29: #{tpu_custom_call.1} parent=1 // pred_fallthru
      _
    // Predicated region
    $region30: #{tpu_custom_call.1} parent=1 // pred_check
      _
    $region31: #{tpu_custom_call.1} parent=1 // pred_check_branch
      %477 = sbr.rel (0) target = $region33
    $region32: #{tpu_custom_call.1} parent=1 // pred_region
      %478 = dma.done [#allocation4], 1024
    $region33: #{tpu_custom_call.1} parent=1 // pred_fallthru
      _
    %479 = vsyncpa [#allocation3], 1
    %480 = vsyncpa [#allocation6], 1
    %481 = vsyncpa [#allocation4], 1

</llo_original>
